<compile_context>
chip_gen: v7x
topology: tpu7x:2x2x1
jax: 0.10.0
libtpu: 0.0.40
codegen_flags: <defaults>
</compile_context>

<pallas_src>
import jax
import jax.numpy as jnp
from jax.experimental import pallas as pl
from jax.experimental.pallas import tpu as pltpu

_MIB = 1024 * 1024
_LANE = 128
_MIN_TOTAL_STEPS = 8        # >= 3-4 steps per TensorCore on dual-TC v7x
_MIN_DMA_RUN_BYTES = 512    # efficient HBM DMA contiguous-run length


# --------------------------------------------------------------------------- #
# Sizing helpers
# --------------------------------------------------------------------------- #
def _physical_vmem_bytes():
    try:
        info = pltpu.get_tpu_info()
        return int(getattr(info, "vmem_capacity_bytes", 64 * _MIB))
    except Exception:
        return 64 * _MIB          # conservative default (v7x-sized VMEM)


def _budget_and_target():
    budget = (_physical_vmem_bytes() * 3) // 4     # ~48 MiB v7x, ~96 MiB v5e/v6e
    target = 12 * _MIB if budget >= 90 * _MIB else 8 * _MIB
    target = min(target, budget // 5)              # 2x(in+out) buffers + slack
    return budget, target


def _sublane_align(dtype):
    # Native packed tile is (8 * 4 / itemsize, 128): f32->8, bf16->16, int8->32.
    return max(8, 32 // jnp.dtype(dtype).itemsize)


def _largest_aligned_divisor(n, cap, align):
    """Largest d <= cap with d % align == 0 and n % d == 0 (assumes n % align == 0)."""
    cap = max(align, min(n, cap))
    cap -= cap % align
    d = cap
    while d > align:
        if n % d == 0:
            return d
        d -= align
    return align


def _pick_rows(nc, bytes_per_row, other_steps, target_bytes):
    """Rows of the flattened N*C axis per block: fill the byte target but keep
    at least _MIN_TOTAL_STEPS grid steps when the problem is large enough."""
    rows = max(1, int(target_bytes) // max(int(bytes_per_row), 1))
    rows = min(rows, max(1, (nc * other_steps) // _MIN_TOTAL_STEPS))
    return max(1, min(nc, rows))


def _vmem_limit(budget, block_bytes):
    # in + out, double-buffered, plus headroom; never below 32 MiB (v5e default
    # scoped VMEM is only 16 MiB) and never above ~75% of physical VMEM.
    return int(min(budget, max(32 * _MIB, 5 * block_bytes)))


# --------------------------------------------------------------------------- #
# Kernels
# --------------------------------------------------------------------------- #
def _copy_kernel(x_ref, o_ref):
    # Quadrant path: the ifftshift permutation lives entirely in the BlockSpec
    # index maps; the kernel body is pure data movement.
    o_ref[...] = x_ref[...]


def _make_w_shift_kernel(W, sw, use_lane_roll):
    """Hybrid path: H half-swap handled by index maps; only the W shift here."""
    def kernel(x_ref, o_ref):
        if use_lane_roll:
            # W % 128 == 0 -> W even -> sw == W // 2, rotation direction is
            # immaterial; native XLU lane rotate, applied to the 3-D block.
            o_ref[...] = pltpu.roll(x_ref[...], sw, axis=2)
        else:
            # Two direct sub-block writes: each element read once, written once.
            o_ref[:, :, 0:sw] = x_ref[:, :, W - sw:W]
            o_ref[:, :, sw:W] = x_ref[:, :, 0:W - sw]
    return kernel


def _make_hw_shift_kernel(H, W, sh, sw, use_lane_roll):
    """General path: full (H, W) block, both shifts in-kernel via direct writes."""
    def kernel(x_ref, o_ref):
        if sw == 0:                                  # degenerate W (W == 1)
            if sh == 0:
                o_ref[...] = x_ref[...]
            else:
                o_ref[:, 0:sh, :] = x_ref[:, H - sh:H, :]
                o_ref[:, sh:H, :] = x_ref[:, 0:H - sh, :]
        elif use_lane_roll:
            # W even and lane aligned: shift == W/2 -> free XLU rotate per strip.
            if sh == 0:
                o_ref[...] = pltpu.roll(x_ref[...], sw, axis=2)
            else:
                o_ref[:, 0:sh, :] = pltpu.roll(x_ref[:, H - sh:H, :], sw, axis=2)
                o_ref[:, sh:H, :] = pltpu.roll(x_ref[:, 0:H - sh, :], sw, axis=2)
        else:
            if sh == 0:
                o_ref[:, :, 0:sw] = x_ref[:, :, W - sw:W]
                o_ref[:, :, sw:W] = x_ref[:, :, 0:W - sw]
            else:
                # Four quadrant writes; no concatenate temporaries.
                o_ref[:, 0:sh, 0:sw] = x_ref[:, H - sh:H, W - sw:W]
                o_ref[:, 0:sh, sw:W] = x_ref[:, H - sh:H, 0:W - sw]
                o_ref[:, sh:H, 0:sw] = x_ref[:, 0:H - sh, W - sw:W]
                o_ref[:, sh:H, sw:W] = x_ref[:, 0:H - sh, 0:W - sw]
    return kernel


# --------------------------------------------------------------------------- #
# Reference (mirrors the PyTorch module exactly) and wrapper
# --------------------------------------------------------------------------- #
def ifftshift_ref(x, startdim=2):
    for axis in range(startdim, x.ndim):
        n = x.shape[axis]
        shift = (n + 1) // 2
        before = jax.lax.slice_in_dim(x, 0, n - shift, axis=axis)
        after = jax.lax.slice_in_dim(x, n - shift, n, axis=axis)
        x = jnp.concatenate([after, before], axis=axis)
    return x


def ifftshift_pallas(x, startdim=2):
    """ifftshift over axes [startdim, ndim) for a 4-D NCHW tensor (startdim=2)."""
    assert x.ndim == 4 and startdim == 2, "kernel specialized for NCHW, startdim=2"
    N, C, H, W = x.shape
    itemsize = jnp.dtype(x.dtype).itemsize
    sh = ((H + 1) // 2) % H        # effective circular shift along H
    sw = ((W + 1) // 2) % W        # effective circular shift along W
    if sh == 0 and sw == 0:        # H == W == 1 -> identity
        return x

    # Lane-sparse last dim: masked vst partial stores + per-step overhead make
    # the Pallas kernel slower than XLA's fused concatenate -> pure-JAX path.
    if W < _LANE:
        return ifftshift_ref(x, startdim)

    nc = N * C
    xf = x.reshape(nc, H, W)       # free reshape; folds N*C so blocks are large
    budget, target = _budget_and_target()
    align = _sublane_align(x.dtype)

    # Path predicates (dtype aware).
    H2, W2 = H // 2, W // 2
    h_split_ok = (H % 2 == 0) and (H2 % align == 0)
    w_quadrant_ok = (W % 2 == 0) and (W2 % _LANE == 0) and \
                    (W2 * itemsize >= _MIN_DMA_RUN_BYTES)
    w_lane_roll = (W % 2 == 0) and (W % _LANE == 0)

    if h_split_ok and w_quadrant_ok:
        # ---- Pure-DMA quadrant swap: copy-only kernel -----------------------
        th = _largest_aligned_divisor(
            H2, max(align, target // max(W2 * itemsize, 1)), align)
        nth = H2 // th
        other = 2 * nth * 2
        rows = _pick_rows(nc, th * W2 * itemsize, other, target)
        block_bytes = rows * th * W2 * itemsize
        grid = (pl.cdiv(nc, rows), 2, nth, 2)
        in_specs = [pl.BlockSpec((rows, th, W2),
                                 lambda i, h, t, w: (i, h * nth + t, w))]
        out_specs = pl.BlockSpec((rows, th, W2),
                                 lambda i, h, t, w: (i, (1 - h) * nth + t, 1 - w))
        kernel = _copy_kernel
        semantics = ("parallel",) * 4
    elif h_split_ok:
        # ---- Hybrid: H half-swap via index map, W shift in-kernel -----------
        th = _largest_aligned_divisor(
            H2, max(align, target // max(W * itemsize, 1)), align)
        nth = H2 // th
        other = 2 * nth
        rows = _pick_rows(nc, th * W * itemsize, other, target)
        block_bytes = rows * th * W * itemsize
        grid = (pl.cdiv(nc, rows), 2, nth)
        in_specs = [pl.BlockSpec((rows, th, W),
                                 lambda i, h, t: (i, h * nth + t, 0))]
        out_specs = pl.BlockSpec((rows, th, W),
                                 lambda i, h, t: (i, (1 - h) * nth + t, 0))
        kernel = _make_w_shift_kernel(W, sw, w_lane_roll)
        semantics = ("parallel",) * 3
    else:
        # ---- General: full (H, W) block, both shifts in-kernel --------------
        hw_bytes = H * W * itemsize
        if 5 * hw_bytes > budget:
            # TODO(synk): tile odd/misaligned-H large images via element-offset
            # index maps instead of falling back to pure JAX.
            return ifftshift_ref(x, startdim)
        rows = _pick_rows(nc, hw_bytes, 1, target)
        block_bytes = rows * hw_bytes
        grid = (pl.cdiv(nc, rows),)
        in_specs = [pl.BlockSpec((rows, H, W), lambda i: (i, 0, 0))]
        out_specs = pl.BlockSpec((rows, H, W), lambda i: (i, 0, 0))
        kernel = _make_hw_shift_kernel(H, W, sh, sw, w_lane_roll)
        semantics = ("parallel",)

    out = pl.pallas_call(
        kernel,
        out_shape=jax.ShapeDtypeStruct((nc, H, W), x.dtype),
        grid=grid,
        in_specs=in_specs,
        out_specs=out_specs,
        compiler_params=pltpu.CompilerParams(
            dimension_semantics=semantics,
            vmem_limit_bytes=_vmem_limit(budget, block_bytes),
        ),
    )(xf)
    return out.reshape(N, C, H, W)


# --------------------------------------------------------------------------- #
# Self-test
# --------------------------------------------------------------------------- #
if __name__ == "__main__":
    keys = jax.random.split(jax.random.PRNGKey(0), 8)

    def check(x, name):
        out = jax.block_until_ready(ifftshift_pallas(x))
        ref = ifftshift_ref(x)
        assert out.shape == ref.shape and out.dtype == ref.dtype, name
        assert jnp.array_equal(out, ref), f"mismatch: {name}"

    # 1) Demo NCHW shape, W < 128: lane-sparse -> handled by the JAX fallback.
    check(jax.random.normal(keys[0], (2, 4, 16, 16), jnp.float32), "small-W fallback")
    # 2) Pure-DMA quadrant-swap path (copy-only kernel, shift in index maps).
    check(jax.random.normal(keys[1], (2, 4, 16, 256), jnp.float32), "f32 quadrant")
    # 3) Hybrid path: H half-swap via index map + in-kernel XLU lane roll.
    check(jax.random.normal(keys[2], (2, 4, 16, 128), jnp.float32), "f32 hybrid roll")
    # 4) Dtype-aware gating: same lane-aligned W but bf16 (half-rows only 256 B)
    #    -> quadrant rejected, routed to the hybrid path instead.
    check(jax.random.normal(keys[3], (2, 4, 32, 256)).astype(jnp.bfloat16), "bf16 hybrid")
    # 5) bf16 quadrant path (W/2*itemsize = 512 B, H/2 multiple of packed sublanes).
    check(jax.random.normal(keys[4], (2, 2, 32, 512)).astype(jnp.bfloat16), "bf16 quadrant")
    # 6) General path: even but misaligned dims -> 4 direct sub-block writes.
    check(jax.random.normal(keys[5], (2, 4, 24, 160), jnp.float32), "general writes")
    # 7) General path: odd H, lane-aligned W -> per-strip lane roll + H strip writes.
    check(jax.random.normal(keys[6], (2, 4, 17, 256), jnp.float32), "general odd-H")

    print("KERNEL_OK")
</pallas_src>

<mosaic_0001>
module attributes {stable_mosaic.version = 11 : i64} {
  func.func @_copy_kernel(%arg0: i32, %arg1: i32, %arg2: i32, %arg3: i32, %arg4: memref<4x8x128xf32, #tpu.memory_space<vmem>>, %arg5: memref<4x8x128xf32, #tpu.memory_space<vmem>>) attributes {dimension_semantics = [#tpu.dimension_semantics<parallel>, #tpu.dimension_semantics<parallel>, #tpu.dimension_semantics<parallel>, #tpu.dimension_semantics<parallel>], iteration_bounds = array<i64: 2, 2, 1, 2>, scalar_prefetch = 0 : i64, scratch_operands = 0 : i64, tpu.core_type = #tpu.core_type<tc>, window_params = [{transform_indices = @transform_0, window_bounds = array<i64: 4, 8, 128>}, {transform_indices = @transform_1, window_bounds = array<i64: 4, 8, 128>}]} {
    %c0 = arith.constant 0 : index
    %c0_0 = arith.constant 0 : index
    %c0_1 = arith.constant 0 : index
    %0 = vector.load %arg4[%c0, %c0_0, %c0_1] : memref<4x8x128xf32, #tpu.memory_space<vmem>>, vector<4x8x128xf32>
    %c0_2 = arith.constant 0 : index
    %c0_3 = arith.constant 0 : index
    %c0_4 = arith.constant 0 : index
    %1 = vector.load %arg5[%c0_2, %c0_3, %c0_4] : memref<4x8x128xf32, #tpu.memory_space<vmem>>, vector<4x8x128xf32>
    tpu.vector_store %arg5[%c0_2, %c0_3, %c0_4], %0 {strides = array<i32>} : memref<4x8x128xf32, #tpu.memory_space<vmem>>, vector<4x8x128xf32>,
    return
  }
  func.func @transform_0(%arg0: i32, %arg1: i32, %arg2: i32, %arg3: i32) -> (i32, i32, i32) {
    %c1_i32 = arith.constant 1 : i32
    %0 = arith.muli %arg1, %c1_i32 : i32
    %1 = arith.addi %0, %arg2 : i32
    %c0_i32 = arith.constant 0 : i32
    return %arg0, %1, %arg3 : i32, i32, i32
  }
  func.func @transform_1(%arg0: i32, %arg1: i32, %arg2: i32, %arg3: i32) -> (i32, i32, i32) {
    %c1_i32 = arith.constant 1 : i32
    %0 = arith.subi %c1_i32, %arg1 : i32
    %c1_i32_0 = arith.constant 1 : i32
    %1 = arith.muli %0, %c1_i32_0 : i32
    %2 = arith.addi %1, %arg2 : i32
    %c1_i32_1 = arith.constant 1 : i32
    %3 = arith.subi %c1_i32_1, %arg3 : i32
    %c0_i32 = arith.constant 0 : i32
    return %arg0, %2, %3 : i32, i32, i32
  }
}

</mosaic_0001>

<llo_original>
// kernel: tpu_custom_call.1
$region0: #{tpu_custom_call.1}
  #allocation0 [shape = 'u32[]', space=smem, size = 0x4, offset = 0x4, fixed_abs, tag = 'smem constant byte address 0x4 - core index']
  #allocation1 [shape = 'u32[144,128]{1,0:T(1,128)}', space=vmem, size = 0x12000, scoped, tag = 'internal scratch']
  %s0 = inlined_call_operand.hbm [shape: f32[8,16,256], index: 0, kind: input, shape index: {}]
  %s1 = inlined_call_operand.hbm [shape: f32[8,16,256], index: 1, kind: output, shape index: {}]
  %s2 = sld [smem:[#allocation0]]
  $region41: #{tpu_custom_call.1} parent=0
    _
  %s4 = ssub.s32 1, %s2
  %s5 = scalar_select 0, %s4, %s2
  $region1: #{tpu_custom_call.1} parent=0
    #allocation2 [shape = 'u8[32768]{0}', space=vmem, size = 0x8000, scoped, tag = 'input window, operand 0']
    #allocation3 [shape = 's32[2]{0}', space=sflag, size = 0x8, scoped, tag = 'scoped memory for tpu_custom_call.1']
    #allocation4 [shape = 's32[2]{0}', space=sflag, size = 0x8, scoped, tag = 'scoped memory for tpu_custom_call.1']
    #allocation5 [shape = 'u8[32768]{0}', space=vmem, size = 0x8000, scoped, tag = 'output window, operand 0']
    %6 = vsyncpa [#allocation3], 0
    %s7 = scalar_lea.sflag [#allocation3], 1
    %8 = vsyncpa %s7, 0
    %9 = vsyncpa [#allocation4], 0
    %s10 = scalar_lea.sflag [#allocation4], 1
    %11 = vsyncpa %s10, 0
    loop: start=0, step=1, limit=10
    $region2: #{tpu_custom_call.1} parent=1 // loop_pre_header
      _
    $region3: #{tpu_custom_call.1} parent=1 // loop_header
      %s13 = sphi 0, %s17
      %p14 = scmp.ge.s32.totalorder %s13, 10
      %s20 = sphi 0, %s46
      %s21 = sphi 0, %s42
      %s22 = sphi 0, %s38
      %s23 = sphi 0, %s34
      %s24 = sphi 0, %s20
      %s25 = sphi 0, %s21
      %s26 = sphi 0, %s22
      %s27 = sphi 0, %s23
      %s28 = sphi 0, %s24
      %s29 = sphi 0, %s25
      %s30 = sphi 0, %s26
      %s31 = sphi 0, %s27
      %s55 = sphi 0, %s57
      %s58 = sphi 0, %s55
      %s59 = sphi 0, %s58
      %s75 = sphi 0, %s59
      %s91 = sphi 0, %s93
      %s94 = sphi 0, %s91
      %s95 = sphi 0, %s94
      %s111 = sphi 0, %s95
    $region4: #{tpu_custom_call.1} parent=1 // loop_header_branch
      %16 = sbr.rel (%p14) target = $region8
    $region5: #{tpu_custom_call.1} parent=1 // loop_body
      %s18 = ssub.s32 %s13, 1
      %s19 = ssub.s32 %s13, 2
      %s32 = sadd.s32 1, %s23
      %p33 = scmp.ge.s32.totalorder %s32, 2
      %s34 = scalar_select %p33, 0, %s32
      %s35 = sadd.s32 1, %s22
      %s36 = scalar_select %p33, %s35, %s22
      %p37 = scmp.ge.s32.totalorder %s36, 1
      %s38 = scalar_select %p37, 0, %s36
      %s39 = sadd.s32 1, %s21
      %s40 = scalar_select %p37, %s39, %s21
      %p41 = scmp.ge.s32.totalorder %s40, 2
      %s42 = scalar_select %p41, 0, %s40
      %s43 = sadd.s32 1, %s20
      %s44 = scalar_select %p41, %s43, %s20
      %p45 = scmp.ge.s32.totalorder %s44, 2
      %s46 = scalar_select %p45, 0, %s44
      %s47 = sadd.s32 %s21, %s22
      %s48 = sadd.s32 %s42, %s38
      %s49 = ssub.s32 %s20, %s46
      %s50 = ssub.s32 %s47, %s48
      %s51 = sor.u32 %s49, %s50
      %s52 = ssub.s32 %s23, %s34
      %s53 = sor.u32 %s51, %s52
      %p54 = scmp.eq.s32.totalorder %s53, 0
      %s56 = sadd.s32 %s55, 1
      %s57 = scalar_select %p54, %s55, %s56
      %p60 = pneg %p54
      %p61 = scmp.eq.s32.totalorder %s13, 7
      %p62 = por %p60, %p61
      %p63 = scmp.ne.s32.totalorder %s55, %s58
      %p64 = scmp.eq.s32.totalorder %s13, 0
      %p65 = por %p63, %p64
      %p66 = scmp.ne.s32.totalorder %s55, %s58
      %p67 = scmp.eq.s32.totalorder %s18, 7
      %p68 = por %p66, %p67
      %p69 = scmp.ne.s32.totalorder %s58, %s59
      %p70 = scmp.eq.s32.totalorder %s18, 0
      %p71 = por %p69, %p70
      %p72 = scmp.ne.s32.totalorder %s58, %s59
      %p73 = scmp.eq.s32.totalorder %s19, 7
      %p74 = por %p72, %p73
      %p76 = scmp.ne.s32.totalorder %s59, %s75
      %p77 = scmp.eq.s32.totalorder %s19, 0
      %p78 = por %p76, %p77
      %s79 = ssub.s32 1, %s21
      %s80 = sadd.s32 %s79, %s22
      %s81 = ssub.s32 1, %s23
      %s82 = ssub.s32 1, %s42
      %s83 = sadd.s32 %s82, %s38
      %s84 = ssub.s32 1, %s34
      %s85 = ssub.s32 %s20, %s46
      %s86 = ssub.s32 %s80, %s83
      %s87 = sor.u32 %s85, %s86
      %s88 = ssub.s32 %s81, %s84
      %s89 = sor.u32 %s87, %s88
      %p90 = scmp.eq.s32.totalorder %s89, 0
      %s92 = sadd.s32 %s91, 1
      %s93 = scalar_select %p90, %s91, %s92
      %p96 = pneg %p90
      %p97 = scmp.eq.s32.totalorder %s13, 7
      %p98 = por %p96, %p97
      %p99 = scmp.ne.s32.totalorder %s91, %s94
      %p100 = scmp.eq.s32.totalorder %s13, 0
      %p101 = por %p99, %p100
      %p102 = scmp.ne.s32.totalorder %s91, %s94
      %p103 = scmp.eq.s32.totalorder %s18, 7
      %p104 = por %p102, %p103
      %p105 = scmp.ne.s32.totalorder %s94, %s95
      %p106 = scmp.eq.s32.totalorder %s18, 0
      %p107 = por %p105, %p106
      %p108 = scmp.ne.s32.totalorder %s94, %s95
      %p109 = scmp.eq.s32.totalorder %s19, 7
      %p110 = por %p108, %p109
      %p112 = scmp.ne.s32.totalorder %s95, %s111
      %p113 = scmp.eq.s32.totalorder %s19, 0
      %p114 = por %p112, %p113
      %p115 = scmp.le.s32.totalorder 1, %s13
      %p116 = scmp.lt.s32.totalorder %s13, 9
      %p117 = pnand %p115, %p116
      %p118 = pneg %p117
      // Predicated region
      $region9: #{tpu_custom_call.1} parent=5 // pred_check
        _
      $region10: #{tpu_custom_call.1} parent=5 // pred_check_branch
        %120 = sbr.rel (%p117) target = $region12
      $region11: #{tpu_custom_call.1} parent=5 // pred_region
        %s121 = ssub.s32 %s13, 1
      $region12: #{tpu_custom_call.1} parent=5 // pred_fallthru
        _
      %p122 = scmp.lt.s32.totalorder %s13, 8
      // Predicated region
      $region13: #{tpu_custom_call.1} parent=5 // pred_check
        %p123 = pneg %p122
      $region14: #{tpu_custom_call.1} parent=5 // pred_check_branch
        %125 = sbr.rel (%p123) target = $region16
      $region15: #{tpu_custom_call.1} parent=5 // pred_region
        // Predicated region
        $region17: #{tpu_custom_call.1} parent=15 // pred_check
          %p126 = pneg %p65
        $region18: #{tpu_custom_call.1} parent=15 // pred_check_branch
          %128 = sbr.rel (%p126) target = $region20
        $region19: #{tpu_custom_call.1} parent=15 // pred_region
          %s129 = sand.u32 %s55, 1
          %s130 = scalar_lea.sflag [#allocation3], %s129
          %s131 = sand.u32 %s55, 1
          %s132 = smul.addr %s131, 32
          %s133 = scalar_lea.vmem [#allocation2], %s132
          %s134 = sadd.s32 %s21, %s22
          %s135 = smul.u32 4, %s20
          %s137 = ssub.s32 512, 512
          %138 = vsyncadd %s130, %s137
          %s139 = smul.addr %s134, 2
          %s140 = sadd.s32 %s23, %s139
          %s141 = smul.addr %s135, 4
          %s142 = sadd.s32 %s140, %s141
          %s143 = smul.addr %s142, 128
          %s144 = scalar_lea.hbm %s0, %s143
          %s145 = sshll.u32 %s133, 4
          %s146 = int_to_ptr.vmem [resolvable:$true] %s145
          %151 = dma.hbm_to_vmem [thread:$0]  %s144, 512, %s146, %s130, 512, 128, 8
        $region20: #{tpu_custom_call.1} parent=15 // pred_fallthru
          _
      $region16: #{tpu_custom_call.1} parent=5 // pred_fallthru
        _
      %p152 = scmp.le.s32.totalorder 1, %s13
      %p153 = scmp.lt.s32.totalorder %s13, 9
      %p154 = pnand %p152, %p153
      %p155 = pneg %p154
      // Predicated region
      $region21: #{tpu_custom_call.1} parent=5 // pred_check
        _
      $region22: #{tpu_custom_call.1} parent=5 // pred_check_branch
        %157 = sbr.rel (%p154) target = $region24
      $region23: #{tpu_custom_call.1} parent=5 // pred_region
        %s158 = ssub.s32 %s13, 1
        %s159 = sand.u32 %s58, 1
        %s160 = scalar_lea.sflag [#allocation3], %s159
        %s161 = sand.u32 %s58, 1
        %s162 = smul.addr %s161, 32
        %s163 = scalar_lea.vmem [#allocation2], %s162
        // Predicated region
        $region25: #{tpu_custom_call.1} parent=23 // pred_check
          %p164 = pneg %p71
        $region26: #{tpu_custom_call.1} parent=23 // pred_check_branch
          %166 = sbr.rel (%p164) target = $region28
        $region27: #{tpu_custom_call.1} parent=23 // pred_region
          %167 = dma.done %s160, 512
        $region28: #{tpu_custom_call.1} parent=23 // pred_fallthru
          _
        %s168 = sand.u32 %s58, 1
        %s169 = scalar_lea.sflag [#allocation3], %s168
        %s170 = sand.u32 %s58, 1
        %s171 = smul.addr %s170, 32
        %s172 = scalar_lea.vmem [#allocation2], %s171
        %p173 = pneg %p71
        %p174 = pneg %p68
        %p175 = pneg %p107
        %p176 = pneg %p104
        %s177 = sand.u32 %s94, 1
        %s178 = scalar_lea.sflag [#allocation4], %s177
        %s179 = sand.u32 %s94, 1
        %s180 = smul.addr %s179, 32
        %s181 = scalar_lea.vmem [#allocation5], %s180
        %s182 = sadd.s32 %s25, %s26
        %s183 = smul.u32 4, %s24
        %s184 = ssub.s32 1, %s25
        %s185 = sadd.s32 %s184, %s26
        %s186 = ssub.s32 1, %s27
        %s187 = smul.u32 4, %s24
        %v188 = vld [vmem:[%s163] sm:$0xff]
        %v189 = vld [vmem:[%s163 + $0x8] sm:$0xff]
        %v190 = vld [vmem:[%s163 + $0x10] sm:$0xff]
        %v191 = vld [vmem:[%s163 + $0x18] sm:$0xff]
        %192 = vst [vmem:[%s181] sm:$0xff] %v188
        %193 = vst [vmem:[%s181 + $0x8] sm:$0xff] %v189
        %194 = vst [vmem:[%s181 + $0x10] sm:$0xff] %v190
        %195 = vst [vmem:[%s181 + $0x18] sm:$0xff] %v191
        %s196 = sand.u32 %s94, 1
        %s197 = scalar_lea.sflag [#allocation4], %s196
        %s198 = sand.u32 %s94, 1
        %s199 = smul.addr %s198, 32
        %s200 = scalar_lea.vmem [#allocation5], %s199
        // Predicated region
        $region29: #{tpu_custom_call.1} parent=23 // pred_check
          %p201 = pneg %p104
        $region30: #{tpu_custom_call.1} parent=23 // pred_check_branch
          %203 = sbr.rel (%p201) target = $region32
        $region31: #{tpu_custom_call.1} parent=23 // pred_region
          %s204 = ssub.s32 1, %s25
          %s205 = sadd.s32 %s204, %s26
          %s206 = ssub.s32 1, %s27
          %s207 = smul.u32 4, %s24
          %s209 = ssub.s32 512, 512
          %210 = vsyncadd %s197, %s209
          %s211 = smul.addr %s205, 2
          %s212 = sadd.s32 %s206, %s211
          %s213 = smul.addr %s207, 4
          %s214 = sadd.s32 %s212, %s213
          %s215 = smul.addr %s214, 128
          %s216 = scalar_lea.hbm %s1, %s215
          %s217 = sshll.u32 %s200, 4
          %s218 = int_to_ptr.vmem [resolvable:$true] %s217
          %223 = dma.vmem_to_hbm [thread:$0]  %s218, 512, %s216, %s197, 128, 512, 8
        $region32: #{tpu_custom_call.1} parent=23 // pred_fallthru
          _
      $region24: #{tpu_custom_call.1} parent=5 // pred_fallthru
        _
      %p224 = scmp.le.s32.totalorder 2, %s13
      // Predicated region
      $region33: #{tpu_custom_call.1} parent=5 // pred_check
        %p225 = pneg %p224
      $region34: #{tpu_custom_call.1} parent=5 // pred_check_branch
        %227 = sbr.rel (%p225) target = $region36
      $region35: #{tpu_custom_call.1} parent=5 // pred_region
        %s228 = ssub.s32 %s13, 2
        // Predicated region
        $region37: #{tpu_custom_call.1} parent=35 // pred_check
          %p229 = pneg %p110
        $region38: #{tpu_custom_call.1} parent=35 // pred_check_branch
          %231 = sbr.rel (%p229) target = $region40
        $region39: #{tpu_custom_call.1} parent=35 // pred_region
          %s232 = sand.u32 %s95, 1
          %s233 = scalar_lea.sflag [#allocation4], %s232
          %s234 = sand.u32 %s95, 1
          %s235 = smul.addr %s234, 32
          %s236 = scalar_lea.vmem [#allocation5], %s235
          %237 = dma.done %s233, 512
        $region40: #{tpu_custom_call.1} parent=35 // pred_fallthru
          _
      $region36: #{tpu_custom_call.1} parent=5 // pred_fallthru
        _
    $region6: #{tpu_custom_call.1} parent=1 // loop_footer
      %s17 = sadd.s32 1, %s13
    $region7: #{tpu_custom_call.1} parent=1 // loop_footer_branch
      %12 = sbr.rel target = $region3
    $region8: #{tpu_custom_call.1} parent=1 // loop_exit
      _
    %238 = vsyncpa [#allocation3], 1
    %s239 = scalar_lea.sflag [#allocation3], 1
    %240 = vsyncpa %s239, 1
    %241 = vsyncpa [#allocation4], 1
    %s242 = scalar_lea.sflag [#allocation4], 1
    %243 = vsyncpa %s242, 1

</llo_original>
